<compile_context>
chip_gen: v5e
topology: v5e:2x2
jax: 0.10.0
libtpu: 0.0.40
codegen_flags: <defaults>
</compile_context>

<pallas_src>
import functools

import jax
import jax.numpy as jnp
from jax import lax
from jax.experimental import pallas as pl
from jax.experimental.pallas import tpu as pltpu

_LANE = 128


def _iou_ce_kernel(pred_ref, tgt_ref, ce_ref, iou_ref,
                   inter_acc, psum_acc, tsum_acc, ce_acc,
                   *, n_cls, tile_pix, n_pix, ragged):
    """Grid = (B, n_hw_tiles). One (C, tile_pix) tile of one batch element per step.

    Accumulates per-class inter / p_sum / t_sum and the CE sum in VMEM scratch across
    the spatial tiles of a batch element; finalizes per-batch partial outputs on the
    last spatial tile.
    """
    hw = pl.program_id(1)
    n_hw = pl.num_programs(1)

    @pl.when(hw == 0)
    def _():
        inter_acc[...] = jnp.zeros_like(inter_acc)
        psum_acc[...] = jnp.zeros_like(psum_acc)
        tsum_acc[...] = jnp.zeros_like(tsum_acc)
        ce_acc[...] = jnp.zeros_like(ce_acc)

    def accumulate(mask_tail):
        x = pred_ref[...].astype(jnp.float32)   # (C, T) logits
        t = tgt_ref[...].astype(jnp.float32)    # (C, T) soft targets

        if mask_tail:
            # Ragged last tile: lanes >= n_pix hold stale/undefined VMEM data.
            # Sanitize with a SELECT (not a multiply) so NaN/Inf garbage cannot poison
            # the softmax or the accumulators.
            lane_c = lax.broadcasted_iota(jnp.int32, (n_cls, tile_pix), 1)
            valid_c = (hw * tile_pix + lane_c) < n_pix          # (C, T) bool
            x = jnp.where(valid_c, x, 0.0)
            t = jnp.where(valid_c, t, 0.0)

        # --- channel softmax (numerically stable); EUP reciprocal + 1 Newton step ---
        m = jnp.max(x, axis=0, keepdims=True)                   # (1, T)
        e = jnp.exp(x - m)                                      # (C, T)
        s = jnp.sum(e, axis=0, keepdims=True)                   # (1, T)
        r = pl.reciprocal(s, approx=True)
        r = r * (2.0 - s * r)                                   # Newton refine (tiny)
        probs = e * r                                           # (C, T)
        lse = m + jnp.log(s)                                    # (1, T) logsumexp

        # --- cross entropy vs. argmax(target, channel); first index on ties ---
        cidx = lax.broadcasted_iota(jnp.int32, (n_cls, tile_pix), 0)
        tmax = jnp.max(t, axis=0, keepdims=True)
        first_idx = jnp.min(jnp.where(t == tmax, cidx, n_cls), axis=0, keepdims=True)
        x_sel = jnp.sum(jnp.where(cidx == first_idx, x, 0.0), axis=0, keepdims=True)
        ce_pix = lse - x_sel                                    # (1, T)

        if mask_tail:
            lane_1 = lax.broadcasted_iota(jnp.int32, (1, tile_pix), 1)
            valid_1 = (hw * tile_pix + lane_1) < n_pix
            ce_pix = jnp.where(valid_1, ce_pix, 0.0)
            # zeroed logits at invalid lanes would contribute 1/C to psum otherwise
            p_for_sum = jnp.where(valid_c, probs, 0.0)
        else:
            p_for_sum = probs
        # note: t is zero at invalid lanes, so inter / t_sum need no extra masking.

        ce_acc[...] += jnp.sum(ce_pix, axis=1, keepdims=True)          # (1, 1)
        inter_acc[...] += jnp.sum(probs * t, axis=1, keepdims=True)    # (C, 1)
        psum_acc[...] += jnp.sum(p_for_sum, axis=1, keepdims=True)     # (C, 1)
        tsum_acc[...] += jnp.sum(t, axis=1, keepdims=True)             # (C, 1)

    if ragged:
        # Masking work is only emitted/executed for the last spatial tile.
        @pl.when(hw < n_hw - 1)
        def _():
            accumulate(mask_tail=False)

        @pl.when(hw == n_hw - 1)
        def _():
            accumulate(mask_tail=True)
    else:
        accumulate(mask_tail=False)

    @pl.when(hw == n_hw - 1)
    def _():
        union = psum_acc[...] + tsum_acc[...] - inter_acc[...]
        iou_ref[...] = (inter_acc[...] + 1e-5) / (union + 1e-5)        # (C, 1)
        ce_ref[...] = ce_acc[...]                                      # (1, 1)


def _choose_tile(hw_pix, n_cls, in_itemsize, target_tile_bytes, max_tile_pix,
                 vmem_budget_bytes):
    """Pick a lane-aligned spatial tile T sized by bytes/step; prefer T | H*W."""
    bytes_per_pix_in = max(1, n_cls * in_itemsize)             # both inputs, 1 buffer
    bytes_per_pix_work = max(1, n_cls * (2 * in_itemsize + 8 * 4))  # dbl-buf + f32 temps
    t_target = max(_LANE, target_tile_bytes // bytes_per_pix_in)
    t_vmem = max(_LANE, vmem_budget_bytes // bytes_per_pix_work)
    hw_lane = -(-hw_pix // _LANE) * _LANE
    T = min(t_target, t_vmem, max_tile_pix, hw_lane)
    T = max(_LANE, (T // _LANE) * _LANE)

    ragged = (hw_pix % T) != 0
    if ragged and hw_pix % _LANE == 0:
        # Search downward (128-steps) for a divisor of H*W, but don't shrink the tile
        # below T/4 (keeps per-step bytes large enough to amortize grid overhead).
        floor = max(_LANE, (T // 4 // _LANE) * _LANE)
        for cand in range(T, floor - _LANE, -_LANE):
            if hw_pix % cand == 0:
                T, ragged = cand, False
                break
    return T, ragged


def iou_ce_loss(pred, target, *,
                target_tile_bytes=2 * 1024 * 1024,
                max_tile_pix=64 * 1024,
                vmem_budget_bytes=24 * 1024 * 1024):
    """pred, target: (B, C, H, W) float arrays (NCHW, as in PyTorch).

    Inputs may be f32 or bf16; they are streamed from HBM in their stored dtype and
    cast to f32 inside the kernel. No padded copies are made in HBM.
    """
    assert pred.shape == target.shape
    B, C, H, W = pred.shape
    HW = H * W
    in_itemsize = pred.dtype.itemsize + target.dtype.itemsize   # bytes/pixel/class

    T, ragged = _choose_tile(HW, C, in_itemsize, target_tile_bytes,
                             max_tile_pix, vmem_budget_bytes)
    n_hw = -(-HW // T)

    pred3 = pred.reshape(B, C, HW)
    tgt3 = target.reshape(B, C, HW)

    kernel = functools.partial(_iou_ce_kernel, n_cls=C, tile_pix=T,
                               n_pix=HW, ragged=ragged)

    # VMEM limit from actual need: double-buffered input blocks + f32 working
    # temporaries + headroom, capped at 48 MiB (v7x TensorCore has only 64 MiB).
    block_in_bytes = C * T * in_itemsize
    work_bytes = 8 * C * T * 4
    vmem_limit = int(min(48 * 1024 * 1024,
                         max(2 * block_in_bytes + work_bytes + 4 * 1024 * 1024,
                             16 * 1024 * 1024)))

    cost = pl.CostEstimate(
        flops=int(12 * B * C * HW),
        transcendentals=int(B * HW * (C + 1)),
        bytes_accessed=int(B * C * HW * in_itemsize + B * (C + 1) * 4),
    )

    ce_part, iou_part = pl.pallas_call(
        kernel,
        out_shape=(
            jax.ShapeDtypeStruct((B, 1, 1), jnp.float32),   # per-batch CE sum
            jax.ShapeDtypeStruct((B, C, 1), jnp.float32),   # per-batch per-class IoU
        ),
        grid_spec=pltpu.PrefetchScalarGridSpec(
            num_scalar_prefetch=0,
            grid=(B, n_hw),
            in_specs=[
                pl.BlockSpec((None, C, T), lambda b, h: (b, 0, h)),
                pl.BlockSpec((None, C, T), lambda b, h: (b, 0, h)),
            ],
            out_specs=(
                pl.BlockSpec((None, 1, 1), lambda b, h: (b, 0, 0)),
                pl.BlockSpec((None, C, 1), lambda b, h: (b, 0, 0)),
            ),
            scratch_shapes=[
                pltpu.VMEM((C, 1), jnp.float32),   # inter accumulator
                pltpu.VMEM((C, 1), jnp.float32),   # p_sum accumulator
                pltpu.VMEM((C, 1), jnp.float32),   # t_sum accumulator
                pltpu.VMEM((1, 1), jnp.float32),   # CE sum accumulator
            ],
        ),
        compiler_params=pltpu.CompilerParams(
            dimension_semantics=("parallel", "arbitrary"),
            vmem_limit_bytes=vmem_limit),
        cost_estimate=cost,
    )(pred3, tgt3)

    # Tiny final reduction in plain JAX (negligible).
    ce_mean = jnp.sum(ce_part) / jnp.float32(B * HW)
    iou_mean = jnp.sum(iou_part) / jnp.float32(B * C)
    return 1.0 - iou_mean + ce_mean


def _reference_loss(pred, target):
    """Plain-JAX replica of the PyTorch forward, for verification."""
    probs = jax.nn.softmax(pred, axis=1)
    logp = jax.nn.log_softmax(pred, axis=1)
    idx = jnp.argmax(target, axis=1)                       # (B, H, W)
    ce = -jnp.mean(jnp.take_along_axis(logp, idx[:, None], axis=1))
    inter = jnp.sum(probs * target, axis=(2, 3))
    union = jnp.sum(probs, axis=(2, 3)) + jnp.sum(target, axis=(2, 3)) - inter
    iou = jnp.mean((inter + 1e-5) / (union + 1e-5))
    return 1.0 - iou + ce


if __name__ == "__main__":
    key = jax.random.PRNGKey(0)
    k1, k2, k3, k4 = jax.random.split(key, 4)

    # Primary test: lane-aligned spatial size (single tile, no masking path).
    B, C, H, W = 2, 4, 16, 16
    pred = jax.random.normal(k1, (B, C, H, W), dtype=jnp.float32)
    target = jax.random.uniform(k2, (B, C, H, W), dtype=jnp.float32)
    loss = jax.block_until_ready(iou_ce_loss(pred, target))
    ref = jax.block_until_ready(_reference_loss(pred, target))
    assert jnp.allclose(loss, ref, rtol=1e-3, atol=1e-4), (loss, ref)

    # Secondary test: ragged spatial size (HW=300) with multiple tiles — exercises the
    # in-kernel last-tile masking path without any wrapper-side padding copy.
    B2, C2, H2, W2 = 2, 4, 12, 25
    pred2 = jax.random.normal(k3, (B2, C2, H2, W2), dtype=jnp.float32)
    target2 = jax.random.uniform(k4, (B2, C2, H2, W2), dtype=jnp.float32)
    loss2 = jax.block_until_ready(iou_ce_loss(pred2, target2, max_tile_pix=128))
    ref2 = jax.block_until_ready(_reference_loss(pred2, target2))
    assert jnp.allclose(loss2, ref2, rtol=1e-3, atol=1e-4), (loss2, ref2)

    print("KERNEL_OK")
</pallas_src>

<mosaic_0001>
module attributes {stable_mosaic.version = 11 : i64} {
  func.func @_iou_ce_kernel(%arg0: i32, %arg1: i32, %arg2: memref<1x4x256xf32, #tpu.memory_space<vmem>>, %arg3: memref<1x4x256xf32, #tpu.memory_space<vmem>>, %arg4: memref<1x1x1xf32, #tpu.memory_space<vmem>>, %arg5: memref<1x4x1xf32, #tpu.memory_space<vmem>>, %arg6: memref<4x1xf32, #tpu.memory_space<vmem>>, %arg7: memref<4x1xf32, #tpu.memory_space<vmem>>, %arg8: memref<4x1xf32, #tpu.memory_space<vmem>>, %arg9: memref<1x1xf32, #tpu.memory_space<vmem>>) attributes {dimension_semantics = [#tpu.dimension_semantics<parallel>, #tpu.dimension_semantics<arbitrary>], iteration_bounds = array<i64: 2, 1>, scalar_prefetch = 0 : i64, scratch_operands = 4 : i64, tpu.core_type = #tpu.core_type<tc>, window_params = [{transform_indices = @transform_0, window_bounds = array<i64: 1, 4, 256>}, {transform_indices = @transform_1, window_bounds = array<i64: 1, 4, 256>}, {transform_indices = @transform_2, window_bounds = array<i64: 1, 1, 1>}, {transform_indices = @transform_3, window_bounds = array<i64: 1, 4, 1>}]} {
    %c0_i32 = arith.constant 0 : i32
    %0 = arith.cmpi eq, %arg1, %c0_i32 : i32
    %1 = arith.extui %0 : i1 to i32
    %c0_i32_0 = arith.constant 0 : i32
    %2 = arith.cmpi ne, %1, %c0_i32_0 : i32
    scf.if %2 {
      %cst_34 = arith.constant 0.000000e+00 : f32
      %63 = vector.broadcast %cst_34 : f32 to vector<4x1xf32>
      %c0_35 = arith.constant 0 : index
      %c0_36 = arith.constant 0 : index
      %64 = vector.load %arg6[%c0_35, %c0_36] : memref<4x1xf32, #tpu.memory_space<vmem>>, vector<4x1xf32>
      tpu.vector_store %arg6[%c0_35, %c0_36], %63 {strides = array<i32>} : memref<4x1xf32, #tpu.memory_space<vmem>>, vector<4x1xf32>,
      %cst_37 = arith.constant 0.000000e+00 : f32
      %65 = vector.broadcast %cst_37 : f32 to vector<4x1xf32>
      %c0_38 = arith.constant 0 : index
      %c0_39 = arith.constant 0 : index
      %66 = vector.load %arg7[%c0_38, %c0_39] : memref<4x1xf32, #tpu.memory_space<vmem>>, vector<4x1xf32>
      tpu.vector_store %arg7[%c0_38, %c0_39], %65 {strides = array<i32>} : memref<4x1xf32, #tpu.memory_space<vmem>>, vector<4x1xf32>,
      %cst_40 = arith.constant 0.000000e+00 : f32
      %67 = vector.broadcast %cst_40 : f32 to vector<4x1xf32>
      %c0_41 = arith.constant 0 : index
      %c0_42 = arith.constant 0 : index
      %68 = vector.load %arg8[%c0_41, %c0_42] : memref<4x1xf32, #tpu.memory_space<vmem>>, vector<4x1xf32>
      tpu.vector_store %arg8[%c0_41, %c0_42], %67 {strides = array<i32>} : memref<4x1xf32, #tpu.memory_space<vmem>>, vector<4x1xf32>,
      %cst_43 = arith.constant 0.000000e+00 : f32
      %69 = vector.broadcast %cst_43 : f32 to vector<1x1xf32>
      %c0_44 = arith.constant 0 : index
      %c0_45 = arith.constant 0 : index
      %70 = vector.load %arg9[%c0_44, %c0_45] : memref<1x1xf32, #tpu.memory_space<vmem>>, vector<1x1xf32>
      tpu.vector_store %arg9[%c0_44, %c0_45], %69 {strides = array<i32>} : memref<1x1xf32, #tpu.memory_space<vmem>>, vector<1x1xf32>,
    } else {
    }
    %c0 = arith.constant 0 : index
    %c0_1 = arith.constant 0 : index
    %c0_2 = arith.constant 0 : index
    %3 = vector.load %arg2[%c0, %c0_1, %c0_2] : memref<1x4x256xf32, #tpu.memory_space<vmem>>, vector<1x4x256xf32>
    %4 = vector.shape_cast %3 : vector<1x4x256xf32> to vector<4x256xf32>
    %c0_3 = arith.constant 0 : index
    %c0_4 = arith.constant 0 : index
    %c0_5 = arith.constant 0 : index
    %5 = vector.load %arg3[%c0_3, %c0_4, %c0_5] : memref<1x4x256xf32, #tpu.memory_space<vmem>>, vector<1x4x256xf32>
    %6 = vector.shape_cast %5 : vector<1x4x256xf32> to vector<4x256xf32>
    %cst = arith.constant dense<0xFF800000> : vector<256xf32>
    %7 = vector.multi_reduction <maximumf>, %4, %cst [0] : vector<4x256xf32> to vector<256xf32>
    %8 = vector.shape_cast %7 : vector<256xf32> to vector<1x256xf32>
    %9 = vector.broadcast %8 : vector<1x256xf32> to vector<4x256xf32>
    %10 = arith.subf %4, %9 : vector<4x256xf32>
    %11 = math.exp %10 : vector<4x256xf32>
    %cst_6 = arith.constant dense<0.000000e+00> : vector<256xf32>
    %12 = vector.multi_reduction <add>, %11, %cst_6 [0] : vector<4x256xf32> to vector<256xf32>
    %13 = vector.shape_cast %12 : vector<256xf32> to vector<1x256xf32>
    %14 = tpu.reciprocal %13 {approx = true} : vector<1x256xf32> -> vector<1x256xf32>
    %15 = arith.mulf %13, %14 : vector<1x256xf32>
    %cst_7 = arith.constant 2.000000e+00 : f32
    %16 = vector.broadcast %cst_7 : f32 to vector<1x256xf32>
    %17 = arith.subf %16, %15 : vector<1x256xf32>
    %18 = arith.mulf %14, %17 : vector<1x256xf32>
    %19 = vector.broadcast %18 : vector<1x256xf32> to vector<4x256xf32>
    %20 = arith.mulf %11, %19 : vector<4x256xf32>
    %21 = math.log %13 : vector<1x256xf32>
    %22 = arith.addf %8, %21 : vector<1x256xf32>
    %23 = tpu.iota {dimensions = array<i32: 0>} : vector<4x256xi32>
    %cst_8 = arith.constant dense<0xFF800000> : vector<256xf32>
    %24 = vector.multi_reduction <maximumf>, %6, %cst_8 [0] : vector<4x256xf32> to vector<256xf32>
    %25 = vector.shape_cast %24 : vector<256xf32> to vector<1x256xf32>
    %26 = vector.broadcast %25 : vector<1x256xf32> to vector<4x256xf32>
    %27 = arith.cmpf oeq, %6, %26 : vector<4x256xf32>
    %c4_i32 = arith.constant 4 : i32
    %28 = vector.broadcast %c4_i32 : i32 to vector<4x256xi32>
    %29 = arith.select %27, %23, %28 : vector<4x256xi1>, vector<4x256xi32>
    %cst_9 = arith.constant dense<2147483647> : vector<256xi32>
    %30 = vector.multi_reduction <minsi>, %29, %cst_9 [0] : vector<4x256xi32> to vector<256xi32>
    %31 = vector.shape_cast %30 : vector<256xi32> to vector<1x256xi32>
    %32 = vector.broadcast %31 : vector<1x256xi32> to vector<4x256xi32>
    %33 = arith.cmpi eq, %23, %32 : vector<4x256xi32>
    %cst_10 = arith.constant 0.000000e+00 : f32
    %34 = vector.broadcast %cst_10 : f32 to vector<4x256xf32>
    %35 = arith.select %33, %4, %34 : vector<4x256xi1>, vector<4x256xf32>
    %cst_11 = arith.constant dense<0.000000e+00> : vector<256xf32>
    %36 = vector.multi_reduction <add>, %35, %cst_11 [0] : vector<4x256xf32> to vector<256xf32>
    %37 = vector.shape_cast %36 : vector<256xf32> to vector<1x256xf32>
    %38 = arith.subf %22, %37 : vector<1x256xf32>
    %c0_12 = arith.constant 0 : index
    %c0_13 = arith.constant 0 : index
    %39 = vector.load %arg9[%c0_12, %c0_13] : memref<1x1xf32, #tpu.memory_space<vmem>>, vector<1x1xf32>
    %cst_14 = arith.constant dense<0.000000e+00> : vector<1xf32>
    %40 = vector.multi_reduction <add>, %38, %cst_14 [1] : vector<1x256xf32> to vector<1xf32>
    %41 = vector.shape_cast %40 : vector<1xf32> to vector<1x1xf32>
    %42 = arith.addf %39, %41 : vector<1x1xf32>
    %c0_15 = arith.constant 0 : index
    %c0_16 = arith.constant 0 : index
    %43 = vector.load %arg9[%c0_15, %c0_16] : memref<1x1xf32, #tpu.memory_space<vmem>>, vector<1x1xf32>
    tpu.vector_store %arg9[%c0_15, %c0_16], %42 {strides = array<i32>} : memref<1x1xf32, #tpu.memory_space<vmem>>, vector<1x1xf32>,
    %c0_17 = arith.constant 0 : index
    %c0_18 = arith.constant 0 : index
    %44 = vector.load %arg6[%c0_17, %c0_18] : memref<4x1xf32, #tpu.memory_space<vmem>>, vector<4x1xf32>
    %45 = arith.mulf %20, %6 : vector<4x256xf32>
    %cst_19 = arith.constant dense<0.000000e+00> : vector<4xf32>
    %46 = vector.multi_reduction <add>, %45, %cst_19 [1] : vector<4x256xf32> to vector<4xf32>
    %47 = vector.shape_cast %46 : vector<4xf32> to vector<4x1xf32>
    %48 = arith.addf %44, %47 : vector<4x1xf32>
    %c0_20 = arith.constant 0 : index
    %c0_21 = arith.constant 0 : index
    %49 = vector.load %arg6[%c0_20, %c0_21] : memref<4x1xf32, #tpu.memory_space<vmem>>, vector<4x1xf32>
    tpu.vector_store %arg6[%c0_20, %c0_21], %48 {strides = array<i32>} : memref<4x1xf32, #tpu.memory_space<vmem>>, vector<4x1xf32>,
    %c0_22 = arith.constant 0 : index
    %c0_23 = arith.constant 0 : index
    %50 = vector.load %arg7[%c0_22, %c0_23] : memref<4x1xf32, #tpu.memory_space<vmem>>, vector<4x1xf32>
    %cst_24 = arith.constant dense<0.000000e+00> : vector<4xf32>
    %51 = vector.multi_reduction <add>, %20, %cst_24 [1] : vector<4x256xf32> to vector<4xf32>
    %52 = vector.shape_cast %51 : vector<4xf32> to vector<4x1xf32>
    %53 = arith.addf %50, %52 : vector<4x1xf32>
    %c0_25 = arith.constant 0 : index
    %c0_26 = arith.constant 0 : index
    %54 = vector.load %arg7[%c0_25, %c0_26] : memref<4x1xf32, #tpu.memory_space<vmem>>, vector<4x1xf32>
    tpu.vector_store %arg7[%c0_25, %c0_26], %53 {strides = array<i32>} : memref<4x1xf32, #tpu.memory_space<vmem>>, vector<4x1xf32>,
    %c0_27 = arith.constant 0 : index
    %c0_28 = arith.constant 0 : index
    %55 = vector.load %arg8[%c0_27, %c0_28] : memref<4x1xf32, #tpu.memory_space<vmem>>, vector<4x1xf32>
    %cst_29 = arith.constant dense<0.000000e+00> : vector<4xf32>
    %56 = vector.multi_reduction <add>, %6, %cst_29 [1] : vector<4x256xf32> to vector<4xf32>
    %57 = vector.shape_cast %56 : vector<4xf32> to vector<4x1xf32>
    %58 = arith.addf %55, %57 : vector<4x1xf32>
    %c0_30 = arith.constant 0 : index
    %c0_31 = arith.constant 0 : index
    %59 = vector.load %arg8[%c0_30, %c0_31] : memref<4x1xf32, #tpu.memory_space<vmem>>, vector<4x1xf32>
    tpu.vector_store %arg8[%c0_30, %c0_31], %58 {strides = array<i32>} : memref<4x1xf32, #tpu.memory_space<vmem>>, vector<4x1xf32>,
    %c0_i32_32 = arith.constant 0 : i32
    %60 = arith.cmpi eq, %arg1, %c0_i32_32 : i32
    %61 = arith.extui %60 : i1 to i32
    %c0_i32_33 = arith.constant 0 : i32
    %62 = arith.cmpi ne, %61, %c0_i32_33 : i32
    scf.if %62 {
      %c0_34 = arith.constant 0 : index
      %c0_35 = arith.constant 0 : index
      %63 = vector.load %arg7[%c0_34, %c0_35] : memref<4x1xf32, #tpu.memory_space<vmem>>, vector<4x1xf32>
      %c0_36 = arith.constant 0 : index
      %c0_37 = arith.constant 0 : index
      %64 = vector.load %arg8[%c0_36, %c0_37] : memref<4x1xf32, #tpu.memory_space<vmem>>, vector<4x1xf32>
      %65 = arith.addf %63, %64 : vector<4x1xf32>
      %c0_38 = arith.constant 0 : index
      %c0_39 = arith.constant 0 : index
      %66 = vector.load %arg6[%c0_38, %c0_39] : memref<4x1xf32, #tpu.memory_space<vmem>>, vector<4x1xf32>
      %67 = arith.subf %65, %66 : vector<4x1xf32>
      %c0_40 = arith.constant 0 : index
      %c0_41 = arith.constant 0 : index
      %68 = vector.load %arg6[%c0_40, %c0_41] : memref<4x1xf32, #tpu.memory_space<vmem>>, vector<4x1xf32>
      %cst_42 = arith.constant 9.99999974E-6 : f32
      %69 = vector.broadcast %cst_42 : f32 to vector<4x1xf32>
      %70 = arith.addf %68, %69 : vector<4x1xf32>
      %cst_43 = arith.constant 9.99999974E-6 : f32
      %71 = vector.broadcast %cst_43 : f32 to vector<4x1xf32>
      %72 = arith.addf %67, %71 : vector<4x1xf32>
      %73 = arith.divf %70, %72 : vector<4x1xf32>
      %c0_44 = arith.constant 0 : index
      %c0_45 = arith.constant 0 : index
      %c0_46 = arith.constant 0 : index
      %74 = vector.load %arg5[%c0_44, %c0_45, %c0_46] : memref<1x4x1xf32, #tpu.memory_space<vmem>>, vector<1x4x1xf32>
      %75 = vector.shape_cast %74 : vector<1x4x1xf32> to vector<4x1xf32>
      %76 = vector.shape_cast %73 : vector<4x1xf32> to vector<1x4x1xf32>
      tpu.vector_store %arg5[%c0_44, %c0_45, %c0_46], %76 {strides = array<i32>} : memref<1x4x1xf32, #tpu.memory_space<vmem>>, vector<1x4x1xf32>,
      %c0_47 = arith.constant 0 : index
      %c0_48 = arith.constant 0 : index
      %77 = vector.load %arg9[%c0_47, %c0_48] : memref<1x1xf32, #tpu.memory_space<vmem>>, vector<1x1xf32>
      %c0_49 = arith.constant 0 : index
      %c0_50 = arith.constant 0 : index
      %c0_51 = arith.constant 0 : index
      %78 = vector.load %arg4[%c0_49, %c0_50, %c0_51] : memref<1x1x1xf32, #tpu.memory_space<vmem>>, vector<1x1x1xf32>
      %79 = vector.shape_cast %78 : vector<1x1x1xf32> to vector<1x1xf32>
      %80 = vector.shape_cast %77 : vector<1x1xf32> to vector<1x1x1xf32>
      tpu.vector_store %arg4[%c0_49, %c0_50, %c0_51], %80 {strides = array<i32>} : memref<1x1x1xf32, #tpu.memory_space<vmem>>, vector<1x1x1xf32>,
    } else {
    }
    return
  }
  func.func @transform_0(%arg0: i32, %arg1: i32) -> (i32, i32, i32) {
    %c0_i32 = arith.constant 0 : i32
    %c0_i32_0 = arith.constant 0 : i32
    return %arg0, %c0_i32, %arg1 : i32, i32, i32
  }
  func.func @transform_1(%arg0: i32, %arg1: i32) -> (i32, i32, i32) {
    %c0_i32 = arith.constant 0 : i32
    %c0_i32_0 = arith.constant 0 : i32
    return %arg0, %c0_i32, %arg1 : i32, i32, i32
  }
  func.func @transform_2(%arg0: i32, %arg1: i32) -> (i32, i32, i32) {
    %c0_i32 = arith.constant 0 : i32
    %c0_i32_0 = arith.constant 0 : i32
    %c0_i32_1 = arith.constant 0 : i32
    return %arg0, %c0_i32, %c0_i32_0 : i32, i32, i32
  }
  func.func @transform_3(%arg0: i32, %arg1: i32) -> (i32, i32, i32) {
    %c0_i32 = arith.constant 0 : i32
    %c0_i32_0 = arith.constant 0 : i32
    %c0_i32_1 = arith.constant 0 : i32
    return %arg0, %c0_i32, %c0_i32_0 : i32, i32, i32
  }
}

</mosaic_0001>

<llo_original>
// kernel: tpu_custom_call.1
$region0: #{tpu_custom_call.1}
  #allocation0 [shape = 'u32[]', space=smem, size = 0x4, offset = 0x4, fixed_abs, tag = 'smem constant byte address 0x4 - core index']
  #allocation1 [shape = 'u32[72,128]{1,0:T(1,128)}', space=vmem, size = 0x9000, scoped, tag = 'internal scratch']
  #allocation2 [shape = 'f32[4,1]{1,0:T(4,128)}', space=vmem, size = 0x800, scoped, tag = 'scratch operand']
  #allocation3 [shape = 'f32[4,1]{1,0:T(4,128)}', space=vmem, size = 0x800, scoped, tag = 'scratch operand']
  #allocation4 [shape = 'f32[4,1]{1,0:T(4,128)}', space=vmem, size = 0x800, scoped, tag = 'scratch operand']
  #allocation5 [shape = 'f32[1,1]{1,0:T(1,128)}', space=vmem, size = 0x200, scoped, tag = 'scratch operand']
  %s0 = inlined_call_operand.hbm [shape: f32[2,4,256], index: 0, kind: input, shape index: {}]
  %s1 = inlined_call_operand.hbm [shape: f32[2,4,256], index: 1, kind: input, shape index: {}]
  %s2 = inlined_call_operand.vmem [shape: f32[2,1,1], index: 2, kind: output, shape index: {0}]
  %s3 = inlined_call_operand.vmem [shape: f32[2,4,1], index: 3, kind: output, shape index: {1}]
  %4 = xla_tuple %s2, %s3
  %s5 = sld [smem:[#allocation0]]
  $region65: #{tpu_custom_call.1} parent=0
    _
  %s7 = ssub.s32 1, %s5
  %s8 = scalar_select 0, %s7, %s5
  $region1: #{tpu_custom_call.1} parent=0
    #allocation6 [shape = 'u8[8192]{0}', space=vmem, size = 0x2000, scoped, tag = 'input window, operand 0']
    #allocation7 [shape = 's32[2]{0}', space=sflag, size = 0x8, scoped, tag = 'scoped memory for tpu_custom_call.1']
    #allocation8 [shape = 'u8[8192]{0}', space=vmem, size = 0x2000, scoped, tag = 'input window, operand 1']
    #allocation9 [shape = 's32[2]{0}', space=sflag, size = 0x8, scoped, tag = 'scoped memory for tpu_custom_call.1']
    %9 = vsyncpa [#allocation7], 0
    %s10 = scalar_lea.sflag [#allocation7], 1
    %11 = vsyncpa %s10, 0
    %12 = vsyncpa [#allocation9], 0
    %s13 = scalar_lea.sflag [#allocation9], 1
    %14 = vsyncpa %s13, 0
    loop: start=0, step=1, limit=4
    $region2: #{tpu_custom_call.1} parent=1 // loop_pre_header
      _
    $region3: #{tpu_custom_call.1} parent=1 // loop_header
      %s16 = sphi 0, %s20
      %p17 = scmp.ge.s32.totalorder %s16, 4
      %s23 = sphi 0, %s35
      %s24 = sphi 0, %s31
      %s25 = sphi 0, %s23
      %s26 = sphi 0, %s24
      %s27 = sphi 0, %s25
      %s28 = sphi 0, %s26
      %s40 = sphi 0, %s42
      %s43 = sphi 0, %s40
      %s44 = sphi 0, %s43
      %s60 = sphi 0, %s44
      %s68 = sphi 0, %s70
      %s71 = sphi 0, %s68
      %s72 = sphi 0, %s71
      %s88 = sphi 0, %s72
      %s94 = sphi 0, %s96
      %s97 = sphi 0, %s94
      %s98 = sphi 0, %s97
      %s114 = sphi 0, %s98
      %s120 = sphi 0, %s122
      %s123 = sphi 0, %s120
      %s124 = sphi 0, %s123
      %s140 = sphi 0, %s124
    $region4: #{tpu_custom_call.1} parent=1 // loop_header_branch
      %19 = sbr.rel (%p17) target = $region8
    $region5: #{tpu_custom_call.1} parent=1 // loop_body
      %s21 = ssub.s32 %s16, 1
      %s22 = ssub.s32 %s16, 2
      %s29 = sadd.s32 1, %s24
      %p30 = scmp.ge.s32.totalorder %s29, 1
      %s31 = scalar_select %p30, 0, %s29
      %s32 = sadd.s32 1, %s23
      %s33 = scalar_select %p30, %s32, %s23
      %p34 = scmp.ge.s32.totalorder %s33, 2
      %s35 = scalar_select %p34, 0, %s33
      %s36 = ssub.s32 %s23, %s35
      %s37 = ssub.s32 %s24, %s31
      %s38 = sor.u32 %s36, %s37
      %p39 = scmp.eq.s32.totalorder %s38, 0
      %s41 = sadd.s32 %s40, 1
      %s42 = scalar_select %p39, %s40, %s41
      %p45 = pneg %p39
      %p46 = scmp.eq.s32.totalorder %s16, 1
      %p47 = por %p45, %p46
      %p48 = scmp.ne.s32.totalorder %s40, %s43
      %p49 = scmp.eq.s32.totalorder %s16, 0
      %p50 = por %p48, %p49
      %p51 = scmp.ne.s32.totalorder %s40, %s43
      %p52 = scmp.eq.s32.totalorder %s21, 1
      %p53 = por %p51, %p52
      %p54 = scmp.ne.s32.totalorder %s43, %s44
      %p55 = scmp.eq.s32.totalorder %s21, 0
      %p56 = por %p54, %p55
      %p57 = scmp.ne.s32.totalorder %s43, %s44
      %p58 = scmp.eq.s32.totalorder %s22, 1
      %p59 = por %p57, %p58
      %p61 = scmp.ne.s32.totalorder %s44, %s60
      %p62 = scmp.eq.s32.totalorder %s22, 0
      %p63 = por %p61, %p62
      %s64 = ssub.s32 %s23, %s35
      %s65 = ssub.s32 %s24, %s31
      %s66 = sor.u32 %s64, %s65
      %p67 = scmp.eq.s32.totalorder %s66, 0
      %s69 = sadd.s32 %s68, 1
      %s70 = scalar_select %p67, %s68, %s69
      %p73 = pneg %p67
      %p74 = scmp.eq.s32.totalorder %s16, 1
      %p75 = por %p73, %p74
      %p76 = scmp.ne.s32.totalorder %s68, %s71
      %p77 = scmp.eq.s32.totalorder %s16, 0
      %p78 = por %p76, %p77
      %p79 = scmp.ne.s32.totalorder %s68, %s71
      %p80 = scmp.eq.s32.totalorder %s21, 1
      %p81 = por %p79, %p80
      %p82 = scmp.ne.s32.totalorder %s71, %s72
      %p83 = scmp.eq.s32.totalorder %s21, 0
      %p84 = por %p82, %p83
      %p85 = scmp.ne.s32.totalorder %s71, %s72
      %p86 = scmp.eq.s32.totalorder %s22, 1
      %p87 = por %p85, %p86
      %p89 = scmp.ne.s32.totalorder %s72, %s88
      %p90 = scmp.eq.s32.totalorder %s22, 0
      %p91 = por %p89, %p90
      %s92 = ssub.s32 %s23, %s35
      %p93 = scmp.eq.s32.totalorder %s92, 0
      %s95 = sadd.s32 %s94, 1
      %s96 = scalar_select %p93, %s94, %s95
      %p99 = pneg %p93
      %p100 = scmp.eq.s32.totalorder %s16, 1
      %p101 = por %p99, %p100
      %p102 = scmp.ne.s32.totalorder %s94, %s97
      %p103 = scmp.eq.s32.totalorder %s16, 0
      %p104 = por %p102, %p103
      %p105 = scmp.ne.s32.totalorder %s94, %s97
      %p106 = scmp.eq.s32.totalorder %s21, 1
      %p107 = por %p105, %p106
      %p108 = scmp.ne.s32.totalorder %s97, %s98
      %p109 = scmp.eq.s32.totalorder %s21, 0
      %p110 = por %p108, %p109
      %p111 = scmp.ne.s32.totalorder %s97, %s98
      %p112 = scmp.eq.s32.totalorder %s22, 1
      %p113 = por %p111, %p112
      %p115 = scmp.ne.s32.totalorder %s98, %s114
      %p116 = scmp.eq.s32.totalorder %s22, 0
      %p117 = por %p115, %p116
      %s118 = ssub.s32 %s23, %s35
      %p119 = scmp.eq.s32.totalorder %s118, 0
      %s121 = sadd.s32 %s120, 1
      %s122 = scalar_select %p119, %s120, %s121
      %p125 = pneg %p119
      %p126 = scmp.eq.s32.totalorder %s16, 1
      %p127 = por %p125, %p126
      %p128 = scmp.ne.s32.totalorder %s120, %s123
      %p129 = scmp.eq.s32.totalorder %s16, 0
      %p130 = por %p128, %p129
      %p131 = scmp.ne.s32.totalorder %s120, %s123
      %p132 = scmp.eq.s32.totalorder %s21, 1
      %p133 = por %p131, %p132
      %p134 = scmp.ne.s32.totalorder %s123, %s124
      %p135 = scmp.eq.s32.totalorder %s21, 0
      %p136 = por %p134, %p135
      %p137 = scmp.ne.s32.totalorder %s123, %s124
      %p138 = scmp.eq.s32.totalorder %s22, 1
      %p139 = por %p137, %p138
      %p141 = scmp.ne.s32.totalorder %s124, %s140
      %p142 = scmp.eq.s32.totalorder %s22, 0
      %p143 = por %p141, %p142
      %p144 = scmp.le.s32.totalorder 1, %s16
      %p145 = scmp.lt.s32.totalorder %s16, 3
      %p146 = pnand %p144, %p145
      %p147 = pneg %p146
      // Predicated region
      $region9: #{tpu_custom_call.1} parent=5 // pred_check
        _
      $region10: #{tpu_custom_call.1} parent=5 // pred_check_branch
        %149 = sbr.rel (%p146) target = $region12
      $region11: #{tpu_custom_call.1} parent=5 // pred_region
        %s150 = ssub.s32 %s16, 1
      $region12: #{tpu_custom_call.1} parent=5 // pred_fallthru
        _
      %p151 = scmp.lt.s32.totalorder %s16, 2
      // Predicated region
      $region13: #{tpu_custom_call.1} parent=5 // pred_check
        %p152 = pneg %p151
      $region14: #{tpu_custom_call.1} parent=5 // pred_check_branch
        %154 = sbr.rel (%p152) target = $region16
      $region15: #{tpu_custom_call.1} parent=5 // pred_region
        // Predicated region
        $region17: #{tpu_custom_call.1} parent=15 // pred_check
          %p155 = pneg %p50
        $region18: #{tpu_custom_call.1} parent=15 // pred_check_branch
          %157 = sbr.rel (%p155) target = $region20
        $region19: #{tpu_custom_call.1} parent=15 // pred_region
          %s158 = sand.u32 %s40, 1
          %s159 = scalar_lea.sflag [#allocation7], %s158
          %s160 = sand.u32 %s40, 1
          %s161 = smul.addr %s160, 8
          %s162 = scalar_lea.vmem [#allocation6], %s161
          %s163 = smul.u32 2, %s24
          %165 = vsyncadd %s159, 0
          %s166 = smul.addr %s23, 2
          %s167 = sadd.s32 %s163, %s166
          %s168 = smul.addr %s167, 4
          %s169 = scalar_lea.hbm %s0, %s168
          %s171 = sshll.u32 %s169, 4
          %s172 = int_to_ptr.hbm [resolvable:$true] %s171
          %s173 = sshll.u32 %s162, 4
          %s174 = int_to_ptr.vmem [resolvable:$true] %s173
          %176 = dma.hbm_to_vmem [thread:$0]  %s172, 128, %s174, %s159
        $region20: #{tpu_custom_call.1} parent=15 // pred_fallthru
          _
        // Predicated region
        $region21: #{tpu_custom_call.1} parent=15 // pred_check
          %p177 = pneg %p78
        $region22: #{tpu_custom_call.1} parent=15 // pred_check_branch
          %179 = sbr.rel (%p177) target = $region24
        $region23: #{tpu_custom_call.1} parent=15 // pred_region
          %s180 = sand.u32 %s68, 1
          %s181 = scalar_lea.sflag [#allocation9], %s180
          %s182 = sand.u32 %s68, 1
          %s183 = smul.addr %s182, 8
          %s184 = scalar_lea.vmem [#allocation8], %s183
          %s185 = smul.u32 2, %s24
          %187 = vsyncadd %s181, 0
          %s188 = smul.addr %s23, 2
          %s189 = sadd.s32 %s185, %s188
          %s190 = smul.addr %s189, 4
          %s191 = scalar_lea.hbm %s1, %s190
          %s193 = sshll.u32 %s191, 4
          %s194 = int_to_ptr.hbm [resolvable:$true] %s193
          %s195 = sshll.u32 %s184, 4
          %s196 = int_to_ptr.vmem [resolvable:$true] %s195
          %198 = dma.hbm_to_vmem [thread:$0]  %s194, 128, %s196, %s181
        $region24: #{tpu_custom_call.1} parent=15 // pred_fallthru
          _
      $region16: #{tpu_custom_call.1} parent=5 // pred_fallthru
        _
      %p199 = scmp.le.s32.totalorder 1, %s16
      %p200 = scmp.lt.s32.totalorder %s16, 3
      %p201 = pnand %p199, %p200
      %p202 = pneg %p201
      // Predicated region
      $region25: #{tpu_custom_call.1} parent=5 // pred_check
        _
      $region26: #{tpu_custom_call.1} parent=5 // pred_check_branch
        %204 = sbr.rel (%p201) target = $region28
      $region27: #{tpu_custom_call.1} parent=5 // pred_region
        %s205 = ssub.s32 %s16, 1
        %s206 = sand.u32 %s43, 1
        %s207 = scalar_lea.sflag [#allocation7], %s206
        %s208 = sand.u32 %s43, 1
        %s209 = smul.addr %s208, 8
        %s210 = scalar_lea.vmem [#allocation6], %s209
        // Predicated region
        $region29: #{tpu_custom_call.1} parent=27 // pred_check
          %p211 = pneg %p56
        $region30: #{tpu_custom_call.1} parent=27 // pred_check_branch
          %213 = sbr.rel (%p211) target = $region32
        $region31: #{tpu_custom_call.1} parent=27 // pred_region
          %215 = dma.done %s207, 128
        $region32: #{tpu_custom_call.1} parent=27 // pred_fallthru
          _
        %s216 = sand.u32 %s71, 1
        %s217 = scalar_lea.sflag [#allocation9], %s216
        %s218 = sand.u32 %s71, 1
        %s219 = smul.addr %s218, 8
        %s220 = scalar_lea.vmem [#allocation8], %s219
        // Predicated region
        $region33: #{tpu_custom_call.1} parent=27 // pred_check
          %p221 = pneg %p84
        $region34: #{tpu_custom_call.1} parent=27 // pred_check_branch
          %223 = sbr.rel (%p221) target = $region36
        $region35: #{tpu_custom_call.1} parent=27 // pred_region
          %225 = dma.done %s217, 128
        $region36: #{tpu_custom_call.1} parent=27 // pred_fallthru
          _
        %s226 = sand.u32 %s43, 1
        %s227 = scalar_lea.sflag [#allocation7], %s226
        %s228 = sand.u32 %s43, 1
        %s229 = smul.addr %s228, 8
        %s230 = scalar_lea.vmem [#allocation6], %s229
        %p231 = pneg %p56
        %p232 = pneg %p53
        %s233 = sand.u32 %s71, 1
        %s234 = scalar_lea.sflag [#allocation9], %s233
        %s235 = sand.u32 %s71, 1
        %s236 = smul.addr %s235, 8
        %s237 = scalar_lea.vmem [#allocation8], %s236
        %p238 = pneg %p84
        %p239 = pneg %p81
        %p240 = pneg %p110
        %p241 = pneg %p107
        %p242 = scmp.lt.s32.totalorder %s25, 1
        %s243 = scalar_select %p242, %s25, 1
        %s244 = scalar_lea.vmem %s2, %s243
        %p245 = pneg %p136
        %p246 = pneg %p133
        %p247 = scmp.lt.s32.totalorder %s25, 1
        %s248 = scalar_select %p247, %s25, 1
        %s249 = smul.addr %s248, 4
        %s250 = scalar_lea.vmem %s3, %s249
        %s251 = smul.u32 2, %s26
        %s252 = smul.u32 2, %s26
        %p253 = scmp.lt.s32.totalorder %s25, 1
        %s254 = scalar_select %p253, %s25, 1
        %s255 = scalar_lea.vmem %s2, %s254
        %p256 = scmp.lt.s32.totalorder %s25, 1
        %s257 = scalar_select %p256, %s25, 1
        %s258 = smul.addr %s257, 4
        %s259 = scalar_lea.vmem %s3, %s258
        %p260 = scmp.eq.s32.totalorder %s26, 0
        // Predicated region
        $region37: #{tpu_custom_call.1} parent=27 // pred_check
          %p261 = pneg %p260
        $region38: #{tpu_custom_call.1} parent=27 // pred_check_branch
          %263 = sbr.rel (%p261) target = $region40
        $region39: #{tpu_custom_call.1} parent=27 // pred_region
          %vm264 = vcmask 3072
          %265 = vst.msk [vmem:[#allocation2] sm:$0xf] %vm264, 0.0
          %266 = vst.msk [vmem:[#allocation3] sm:$0xf] %vm264, 0.0
          %267 = vst.msk [vmem:[#allocation4] sm:$0xf] %vm264, 0.0
          %vm268 = vcmask 0
          %269 = vst.msk [vmem:[#allocation5] sm:$0x1] %vm268, 0.0
        $region40: #{tpu_custom_call.1} parent=27 // pred_fallthru
          _
        %v270 = vld [vmem:[%s210] sm:$0xff]
        %v271 = vld [vmem:[%s220] sm:$0xff]
        %273 = vst [vmem:[#allocation1] ss:$2 sm:$0xff] %v270
        %v274 = vld.sshfl [vmem:[#allocation1] sm:$0xff pattern:$0x75316420]
        %v275 = vld.sshfl [vmem:[#allocation1 + $0x8] sm:$0xff pattern:$0x75316420]
        %vm278 = vcmask 1043456
        %v279 = vsel %vm278, %v274, -inf
        %v280 = vrot.slane %v279, 4
        %v281 = vmax.f32 %v279, %v280
        %v282 = vrot.slane %v281, 2
        %v283 = vmax.f32 %v281, %v282
        %v284 = vrot.slane %v283, 1
        %v285 = vmax.f32 %v283, %v284
        %v286 = vsel %vm278, %v275, -inf
        %v287 = vrot.slane %v286, 4
        %v288 = vmax.f32 %v286, %v287
        %v289 = vrot.slane %v288, 2
        %v290 = vmax.f32 %v288, %v289
        %v291 = vrot.slane %v290, 1
        %v292 = vmax.f32 %v290, %v291
        %v295 = vrot.slane %v292, 4
        %v296 = vsel %vm278, %v285, %v295
        %v298 = vsub.f32 %v270, %v296
        %v299 = vmul.f32 %v298, 1.442695
        %v300 = vpow.pop %v299
        %302 = vst [vmem:[#allocation1] ss:$2 sm:$0xff] %v300
        %v303 = vld.sshfl [vmem:[#allocation1] sm:$0xff pattern:$0x75316420]
        %v304 = vld.sshfl [vmem:[#allocation1 + $0x8] sm:$0xff pattern:$0x75316420]
        %v307 = vsel %vm278, %v303, 0.0
        %v308 = vrot.slane %v307, 4
        %v309 = vadd.f32 %v307, %v308
        %v310 = vrot.slane %v309, 2
        %v311 = vadd.f32 %v309, %v310
        %v312 = vrot.slane %v311, 1
        %v313 = vadd.f32 %v311, %v312
        %v314 = vsel %vm278, %v304, 0.0
        %v315 = vrot.slane %v314, 4
        %v316 = vadd.f32 %v314, %v315
        %v317 = vrot.slane %v316, 2
        %v318 = vadd.f32 %v316, %v317
        %v319 = vrot.slane %v318, 1
        %v320 = vadd.f32 %v318, %v319
        %v321 = vrcp.pop %v313
        %v322 = vrcp.pop %v320
        %v323 = vmul.f32 %v313, %v321
        %v324 = vmul.f32 %v320, %v322
        %v325 = vsub.f32 2.0, %v323
        %v326 = vsub.f32 2.0, %v324
        %v327 = vmul.f32 %v321, %v325
        %v328 = vmul.f32 %v322, %v326
        %v331 = vrot.slane %v328, 4
        %v332 = vsel %vm278, %v327, %v331
        %v334 = vmul.f32 %v300, %v332
        %v335 = vlog2.pop %v313
        %v336 = vmul.f32 %v335, 0.6931472
        %v337 = vlog2.pop %v320
        %v338 = vmul.f32 %v337, 0.6931472
        %v339 = vadd.f32 %v285, %v336
        %v340 = vadd.f32 %v292, %v338
        %v341 = vlaneseq
        %v342 = vshrl.u32 %v341, 7
        %344 = vst [vmem:[#allocation1] ss:$2 sm:$0xff] %v271
        %v345 = vld.sshfl [vmem:[#allocation1] sm:$0xff pattern:$0x75316420]
        %v346 = vld.sshfl [vmem:[#allocation1 + $0x8] sm:$0xff pattern:$0x75316420]
        %v349 = vsel %vm278, %v345, -inf
        %v350 = vrot.slane %v349, 4
        %v351 = vmax.f32 %v349, %v350
        %v352 = vrot.slane %v351, 2
        %v353 = vmax.f32 %v351, %v352
        %v354 = vrot.slane %v353, 1
        %v355 = vmax.f32 %v353, %v354
        %v356 = vsel %vm278, %v346, -inf
        %v357 = vrot.slane %v356, 4
        %v358 = vmax.f32 %v356, %v357
        %v359 = vrot.slane %v358, 2
        %v360 = vmax.f32 %v358, %v359
        %v361 = vrot.slane %v360, 1
        %v362 = vmax.f32 %v360, %v361
        %v365 = vrot.slane %v362, 4
        %v366 = vsel %vm278, %v355, %v365
        %vm368 = vcmp.eq.f32.partialorder %v271, %v366
        %v370 = vunpack.c.l.s4 839922192
        %v371 = vunpack.c.0.s8 %v370
        %v372 = vperm.slane %v342, %v371
        %v373 = vsel %vm368, %v372, 4
        %374 = vst [vmem:[#allocation1] ss:$2 sm:$0xff] %v373
        %v375 = vld.sshfl [vmem:[#allocation1] sm:$0xff pattern:$0x75316420]
        %v376 = vld.sshfl [vmem:[#allocation1 + $0x8] sm:$0xff pattern:$0x75316420]
        %v377 = vsel %vm278, %v375, 2147483647
        %v378 = vrot.slane %v377, 4
        %vm379 = vcmp.lt.s32.totalorder %v377, %v378
        %v380 = vsel %vm379, %v377, %v378
        %v381 = vrot.slane %v380, 2
        %vm382 = vcmp.lt.s32.totalorder %v380, %v381
        %v383 = vsel %vm382, %v380, %v381
        %v384 = vrot.slane %v383, 1
        %vm385 = vcmp.lt.s32.totalorder %v383, %v384
        %v386 = vsel %vm385, %v383, %v384
        %v387 = vsel %vm278, %v376, 2147483647
        %v388 = vrot.slane %v387, 4
        %vm389 = vcmp.lt.s32.totalorder %v387, %v388
        %v390 = vsel %vm389, %v387, %v388
        %v391 = vrot.slane %v390, 2
        %vm392 = vcmp.lt.s32.totalorder %v390, %v391
        %v393 = vsel %vm392, %v390, %v391
        %v394 = vrot.slane %v393, 1
        %vm395 = vcmp.lt.s32.totalorder %v393, %v394
        %v396 = vsel %vm395, %v393, %v394
        %vm397 = vcmp.eq.s32.totalorder %v342, %v386
        %vm398 = vcmp.eq.s32.totalorder %v342, %v396
        %399 = vst [vmem:[#allocation1] ss:$2 sm:$0xff] %v270
        %v400 = vld.sshfl [vmem:[#allocation1] sm:$0xff pattern:$0x75316420]
        %v401 = vld.sshfl [vmem:[#allocation1 + $0x8] sm:$0xff pattern:$0x75316420]
        %v404 = vsel %vm397, %v400, 0.0
        %v405 = vsel %vm398, %v401, 0.0
        %v406 = vsel %vm278, %v404, 0.0
        %v407 = vrot.slane %v406, 4
        %v408 = vadd.f32 %v406, %v407
        %v409 = vrot.slane %v408, 2
        %v410 = vadd.f32 %v408, %v409
        %v411 = vrot.slane %v410, 1
        %v412 = vadd.f32 %v410, %v411
        %v413 = vsel %vm278, %v405, 0.0
        %v414 = vrot.slane %v413, 4
        %v415 = vadd.f32 %v413, %v414
        %v416 = vrot.slane %v415, 2
        %v417 = vadd.f32 %v415, %v416
        %v418 = vrot.slane %v417, 1
        %v419 = vadd.f32 %v417, %v418
        %v420 = vsub.f32 %v339, %v412
        %v421 = vsub.f32 %v340, %v419
        %v422 = vld [vmem:[#allocation5] sm:$0x1]
        %v423 = vadd.f32 %v420, %v421
        %424 = vadd.xlane.f32.xlu0 %v423
        %v425 = vpop.xlane.xlu0 %424
        %v426 = vadd.f32 %v422, %v425
        %vm427 = vcmask 0
        %428 = vst.msk [vmem:[#allocation5] sm:$0x1] %vm427, %v426
        %v429 = vld [vmem:[#allocation2] sm:$0xf]
        %v430 = vmul.f32 %v334, %v271
        %432 = vst [vmem:[#allocation1] ss:$2 sm:$0xff] %v430
        %v433 = vld.sshfl [vmem:[#allocation1] sm:$0xff pattern:$0x75316420]
        %v434 = vld.sshfl [vmem:[#allocation1 + $0x8] sm:$0xff pattern:$0x75316420]
        %v437 = vsel %vm278, %v433, 0.0
        %v438 = vsel %vm278, %v434, 0.0
        %v439 = vadd.f32 %v437, %v438
        %440 = vadd.xlane.f32.xlu0 %v439
        %v441 = vpop.xlane.xlu0 %440
        %v442 = vadd.f32 %v429, %v441
        %vm443 = vcmask 3072
        %444 = vst.msk [vmem:[#allocation2] sm:$0xf] %vm443, %v442
        %v445 = vld [vmem:[#allocation3] sm:$0xf]
        %447 = vst [vmem:[#allocation1] ss:$2 sm:$0xff] %v334
        %v448 = vld.sshfl [vmem:[#allocation1] sm:$0xff pattern:$0x75316420]
        %v449 = vld.sshfl [vmem:[#allocation1 + $0x8] sm:$0xff pattern:$0x75316420]
        %v452 = vsel %vm278, %v448, 0.0
        %v453 = vsel %vm278, %v449, 0.0
        %v454 = vadd.f32 %v452, %v453
        %455 = vadd.xlane.f32.xlu0 %v454
        %v456 = vpop.xlane.xlu0 %455
        %v457 = vadd.f32 %v445, %v456
        %458 = vst.msk [vmem:[#allocation3] sm:$0xf] %vm443, %v457
        %v459 = vld [vmem:[#allocation4] sm:$0xf]
        %460 = vst [vmem:[#allocation1] ss:$2 sm:$0xff] %v271
        %v461 = vld.sshfl [vmem:[#allocation1] sm:$0xff pattern:$0x75316420]
        %v462 = vld.sshfl [vmem:[#allocation1 + $0x8] sm:$0xff pattern:$0x75316420]
        %v465 = vsel %vm278, %v461, 0.0
        %v466 = vsel %vm278, %v462, 0.0
        %v467 = vadd.f32 %v465, %v466
        %468 = vadd.xlane.f32.xlu0 %v467
        %v469 = vpop.xlane.xlu0 %468
        %v470 = vadd.f32 %v459, %v469
        %471 = vst.msk [vmem:[#allocation4] sm:$0xf] %vm443, %v470
        // Predicated region
        $region41: #{tpu_custom_call.1} parent=27 // pred_check
          %p472 = pneg %p260
        $region42: #{tpu_custom_call.1} parent=27 // pred_check_branch
          %474 = sbr.rel (%p472) target = $region44
        $region43: #{tpu_custom_call.1} parent=27 // pred_region
          %v475 = vld [vmem:[#allocation3] sm:$0xf]
          %v476 = vld [vmem:[#allocation4] sm:$0xf]
          %v477 = vadd.f32 %v475, %v476
          %v478 = vld [vmem:[#allocation2] sm:$0xf]
          %v479 = vsub.f32 %v477, %v478
          %v480 = vadd.f32 %v478, 1e-05
          %v481 = vadd.f32 %v479, 1e-05
          %v482 = vrcp.pop %v481
          %v483 = vmul.f32 %v481, %v482
          %v484 = vsub.f32 1.0, %v483
          %v485 = vmul.f32 %v482, %v484
          %v486 = vadd.f32 %v482, %v485
          %vm487 = vweird.f32 %v481
          %vm488 = vweird.f32 %v482
          %vm489 = vmor %vm487, %vm488
          %v490 = vsel %vm489, %v482, %v486
          %v491 = vand.u32 2147483647, %v481
          %vm492 = vcmp.eq.f32.partialorder %v491, 8.507059e+37
          %v493 = vand.u32 %v481, 2147483648
          %v494 = vor.u32 1.1754944e-38, %v493
          %v495 = vsel %vm492, %v494, %v490
          %v496 = vmul.f32 %v480, %v495
          %497 = vst.msk [vmem:[%s259] sm:$0xf] %vm443, %v496
          %v498 = vld [vmem:[#allocation5] sm:$0x1]
          %499 = vst.msk [vmem:[%s255] sm:$0x1] %vm427, %v498
        $region44: #{tpu_custom_call.1} parent=27 // pred_fallthru
          _
        %p500 = scmp.lt.s32.totalorder %s25, 1
        %s501 = scalar_select %p500, %s25, 1
        %s502 = scalar_lea.vmem %s2, %s501
        %p503 = scmp.lt.s32.totalorder %s25, 1
        %s504 = scalar_select %p503, %s25, 1
        %s505 = smul.addr %s504, 4
        %s506 = scalar_lea.vmem %s3, %s505
        // Predicated region
        $region45: #{tpu_custom_call.1} parent=27 // pred_check
          %p507 = pneg %p107
        $region46: #{tpu_custom_call.1} parent=27 // pred_check_branch
          %509 = sbr.rel (%p507) target = $region48
        $region47: #{tpu_custom_call.1} parent=27 // pred_region
          _
        $region48: #{tpu_custom_call.1} parent=27 // pred_fallthru
          _
        // Predicated region
        $region49: #{tpu_custom_call.1} parent=27 // pred_check
          %p510 = pneg %p133
        $region50: #{tpu_custom_call.1} parent=27 // pred_check_branch
          %512 = sbr.rel (%p510) target = $region52
        $region51: #{tpu_custom_call.1} parent=27 // pred_region
          _
        $region52: #{tpu_custom_call.1} parent=27 // pred_fallthru
          _
      $region28: #{tpu_custom_call.1} parent=5 // pred_fallthru
        _
      %p513 = scmp.le.s32.totalorder 2, %s16
      // Predicated region
      $region53: #{tpu_custom_call.1} parent=5 // pred_check
        %p514 = pneg %p513
      $region54: #{tpu_custom_call.1} parent=5 // pred_check_branch
        %516 = sbr.rel (%p514) target = $region56
      $region55: #{tpu_custom_call.1} parent=5 // pred_region
        %s517 = ssub.s32 %s16, 2
        // Predicated region
        $region57: #{tpu_custom_call.1} parent=55 // pred_check
          %p518 = pneg %p113
        $region58: #{tpu_custom_call.1} parent=55 // pred_check_branch
          %520 = sbr.rel (%p518) target = $region60
        $region59: #{tpu_custom_call.1} parent=55 // pred_region
          %p521 = scmp.lt.s32.totalorder %s27, 1
          %s522 = scalar_select %p521, %s27, 1
          %s523 = scalar_lea.vmem %s2, %s522
        $region60: #{tpu_custom_call.1} parent=55 // pred_fallthru
          _
        // Predicated region
        $region61: #{tpu_custom_call.1} parent=55 // pred_check
          %p524 = pneg %p139
        $region62: #{tpu_custom_call.1} parent=55 // pred_check_branch
          %526 = sbr.rel (%p524) target = $region64
        $region63: #{tpu_custom_call.1} parent=55 // pred_region
          %p527 = scmp.lt.s32.totalorder %s27, 1
          %s528 = scalar_select %p527, %s27, 1
          %s529 = smul.addr %s528, 4
          %s530 = scalar_lea.vmem %s3, %s529
        $region64: #{tpu_custom_call.1} parent=55 // pred_fallthru
          _
      $region56: #{tpu_custom_call.1} parent=5 // pred_fallthru
        _
    $region6: #{tpu_custom_call.1} parent=1 // loop_footer
      %s20 = sadd.s32 1, %s16
    $region7: #{tpu_custom_call.1} parent=1 // loop_footer_branch
      %15 = sbr.rel target = $region3
    $region8: #{tpu_custom_call.1} parent=1 // loop_exit
      _
    %531 = vsyncpa [#allocation7], 1
    %s532 = scalar_lea.sflag [#allocation7], 1
    %533 = vsyncpa %s532, 1
    %534 = vsyncpa [#allocation9], 1
    %s535 = scalar_lea.sflag [#allocation9], 1
    %536 = vsyncpa %s535, 1

</llo_original>
